<compile_context>
chip_gen: v7x
topology: tpu7x:2x2x1
jax: 0.10.0
libtpu: 0.0.40
codegen_flags: <defaults>
</compile_context>

<pallas_src>
import functools

import jax
import jax.numpy as jnp
from jax.experimental import pallas as pl
from jax.experimental.pallas import tpu as pltpu

BN_EPS = 1e-5
LANES = 128


def _round_up(x, m):
    return (x + m - 1) // m * m


def mlp_kernel(x_ref, wt_ref, gamma_ref, beta_ref, o_ref):
    # Linear (no bias: it cancels exactly under training-mode BatchNorm).
    # x arrives already in bf16 (cast once in the wrapper, not per grid step).
    h = jnp.dot(x_ref[...], wt_ref[...], preferred_element_type=jnp.float32)  # (N, TILE_F) f32

    # BatchNorm1d training-mode per-feature batch stats, two-pass (no cancellation).
    inv_n = 1.0 / h.shape[0]
    mean = jnp.sum(h, axis=0, keepdims=True) * inv_n            # (1, TILE_F)
    d = h - mean
    var = jnp.sum(d * d, axis=0, keepdims=True) * inv_n         # biased var (PyTorch normalization)
    inv_std = jax.lax.rsqrt(var + BN_EPS)

    # Folded BN affine: y = (h - mean) * (gamma * inv_std) + beta ; epilogue stays f32.
    scale = gamma_ref[...] * inv_std
    y = d * scale + beta_ref[...]

    # ReLU
    o_ref[...] = jnp.maximum(y, 0.0).astype(o_ref.dtype)


def prepare_params(w, b, gamma, beta):
    """One-time parameter prep (hoisted out of the per-call path).

    - W (fout, fin) is transposed to (fin, fout_pad) and cast to bf16.
    - fout is zero-padded up to a multiple of 128 (lane-dense weight stream).
    - The Linear bias is dropped: under training-mode BatchNorm it cancels exactly.
    """
    del b  # mathematically a no-op under training-mode BatchNorm
    fout, fin = w.shape
    fout_pad = _round_up(fout, LANES)
    wt = jnp.zeros((fin, fout_pad), jnp.bfloat16).at[:, :fout].set(
        w.T.astype(jnp.bfloat16))
    g2 = jnp.zeros((1, fout_pad), jnp.float32).at[0, :fout].set(
        gamma.astype(jnp.float32))
    be2 = jnp.zeros((1, fout_pad), jnp.float32).at[0, :fout].set(
        beta.astype(jnp.float32))
    return wt, g2, be2, fout


def _select_tile_f(n, fin, fout_pad, out_bytes):
    """fin/VMEM-aware fout tile selection. Returns (tile_f, est_working_set_bytes)."""
    # Target ~4 MiB of bf16 weights per grid step (weight stream is the dominant
    # HBM term); multi-hundred-KiB-to-few-MiB tiles reach ~85%+ of HBM roofline.
    W_TILE_TARGET = 4 << 20
    target = max(LANES, (W_TILE_TARGET // (fin * 2)) // LANES * LANES)
    target = min(target, fout_pad)

    # Keep the whole working set well under the tightest per-TC VMEM budget
    # (v7x: 64 MiB physical, 32 MiB scoped default). Budget ~40 MiB.
    VMEM_BUDGET = 40 << 20

    def working_set(tf):
        w = 2 * fin * tf * 2            # double-buffered bf16 weight tile
        o = 2 * n * tf * out_bytes      # double-buffered output tile
        xb = 2 * n * fin * 2            # resident bf16 x (conservatively x2)
        hb = 2 * n * tf * 4             # f32 h intermediate spill + slack
        return w + o + xb + hb

    while target > LANES and working_set(target) > VMEM_BUDGET:
        target -= LANES

    # tile_f must evenly divide fout_pad (both multiples of 128): pick the
    # largest 128*d with d | (fout_pad/128) and 128*d <= target.
    m = fout_pad // LANES
    d_best = 1
    for d in range(1, m + 1):
        if m % d == 0 and d * LANES <= target:
            d_best = d

    # v7x: ensure >= 2 grid tiles so ("parallel",) spans both TensorCores.
    # (On single-TC v5e/v6e the halved tile is still in the multi-KiB+ class,
    # so the per-step overhead cost is negligible.)
    if m // d_best < 2 and m >= 2:
        for d in range(m // 2, 0, -1):
            if m % d == 0:
                d_best = d
                break

    tile_f = d_best * LANES
    return tile_f, working_set(tile_f)


@functools.partial(jax.jit, static_argnames=("fout", "out_dtype"))
def mlp_forward(x, wt, gamma2, beta2, *, fout, out_dtype=jnp.float32):
    """x: (N, fin) f32; wt: (fin, fout_pad) bf16; gamma2/beta2: (1, fout_pad) f32."""
    n, fin = x.shape
    fout_pad = wt.shape[1]
    out_bytes = jnp.dtype(out_dtype).itemsize

    tile_f, est_ws = _select_tile_f(n, fin, fout_pad, out_bytes)
    grid = (fout_pad // tile_f,)

    # Explicit scoped-VMEM request: estimated working set + headroom, clamped to a
    # range that is safe on every generation (v5e default scoped is only 16 MiB;
    # v7x physical is 64 MiB, so never ask for more than 56 MiB).
    vmem_limit = int(min(max(est_ws + (8 << 20), 32 << 20), 56 << 20))

    # Cast x to bf16 once here (tiny XLA op) instead of per grid step in the kernel.
    x_bf16 = x.astype(jnp.bfloat16)

    out = pl.pallas_call(
        mlp_kernel,
        # Store straight into (n, fout): no post-call slice / extra HBM round-trip.
        # Only the final partial tile (if fout % 128 != 0) uses a masked store.
        out_shape=jax.ShapeDtypeStruct((n, fout), out_dtype),
        grid_spec=pltpu.PrefetchScalarGridSpec(
            num_scalar_prefetch=0,
            grid=grid,
            in_specs=[
                pl.BlockSpec((n, fin), lambda j: (0, 0)),       # x: resident across tiles
                pl.BlockSpec((fin, tile_f), lambda j: (0, j)),  # W: streamed per fout tile
                pl.BlockSpec((1, tile_f), lambda j: (0, j)),    # gamma
                pl.BlockSpec((1, tile_f), lambda j: (0, j)),    # beta
            ],
            out_specs=pl.BlockSpec((n, tile_f), lambda j: (0, j)),
        ),
        compiler_params=pltpu.CompilerParams(
            # fout tiles are fully independent (BN stats are per feature) ->
            # safe to shard across TensorCores on v7x.
            dimension_semantics=("parallel",),
            vmem_limit_bytes=vmem_limit,
        ),
    )(x_bf16, wt, gamma2, beta2)

    return out


def mlp_reference_f32(x, w, b, gamma, beta):
    """Exact PyTorch-module math in f32 (with bias, training-mode BN, ReLU)."""
    h = x @ w.T + b
    mean = jnp.mean(h, axis=0, keepdims=True)
    var = jnp.mean((h - mean) ** 2, axis=0, keepdims=True)
    y = (h - mean) / jnp.sqrt(var + BN_EPS) * gamma + beta
    return jnp.maximum(y, 0.0)


def mlp_reference_bf16_matmul(x, w, gamma, beta):
    """Precision-matched reference: bf16 matmul operands, f32 stats/epilogue, no bias."""
    h = jnp.dot(x.astype(jnp.bfloat16), w.T.astype(jnp.bfloat16),
                preferred_element_type=jnp.float32)
    mean = jnp.mean(h, axis=0, keepdims=True)
    var = jnp.mean((h - mean) ** 2, axis=0, keepdims=True)
    y = (h - mean) / jnp.sqrt(var + BN_EPS) * gamma + beta
    return jnp.maximum(y, 0.0)


def _run_case(key, n, fin, fout, out_dtype=jnp.float32):
    kx, kw, kb, kg, kbe = jax.random.split(key, 5)
    x = jax.random.normal(kx, (n, fin), dtype=jnp.float32)
    w = jax.random.normal(kw, (fout, fin), dtype=jnp.float32) * (1.0 / jnp.sqrt(fin))
    b = jax.random.normal(kb, (fout,), dtype=jnp.float32) * 0.1
    gamma = 1.0 + 0.1 * jax.random.normal(kg, (fout,), dtype=jnp.float32)
    beta = 0.1 * jax.random.normal(kbe, (fout,), dtype=jnp.float32)

    wt, g2, be2, fout_ = prepare_params(w, b, gamma, beta)
    out = mlp_forward(x, wt, g2, be2, fout=fout_, out_dtype=out_dtype)
    out = jax.block_until_ready(out)
    assert out.shape == (n, fout)
    out_f32 = out.astype(jnp.float32)

    ref_matched = mlp_reference_bf16_matmul(x, w, gamma, beta)
    ref_f32 = mlp_reference_f32(x, w, b, gamma, beta)

    if out_dtype == jnp.float32:
        assert jnp.allclose(out_f32, ref_matched, atol=1e-4, rtol=1e-4), \
            "mismatch vs precision-matched reference"
        assert jnp.allclose(out_f32, ref_f32, atol=5e-2, rtol=5e-2), \
            "mismatch vs f32 reference"
    else:
        # bf16 output path: compare loosely (bf16 rounding of the stored result).
        assert jnp.allclose(out_f32, ref_matched, atol=5e-2, rtol=5e-2), \
            "mismatch vs precision-matched reference (bf16 out)"


if __name__ == "__main__":
    key = jax.random.PRNGKey(0)
    k1, k2, k3 = jax.random.split(key, 3)

    # Small shapes consistent with MLP(fin, fout): batch N=8, fin=32, fout=64.
    _run_case(k1, n=8, fin=32, fout=64, out_dtype=jnp.float32)

    # Multi-tile grid (>=2 fout tiles) with a partial final output tile (fout=200).
    _run_case(k2, n=16, fin=48, fout=200, out_dtype=jnp.float32)

    # bf16 output path (large-N regime option where writeback bytes dominate).
    _run_case(k3, n=8, fin=32, fout=64, out_dtype=jnp.bfloat16)

    print("KERNEL_OK")
</pallas_src>

<mosaic_0001>
module attributes {stable_mosaic.version = 11 : i64} {
  func.func @mlp_kernel(%arg0: i32, %arg1: memref<8x32xbf16, #tpu.memory_space<vmem>>, %arg2: memref<32x128xbf16, #tpu.memory_space<vmem>>, %arg3: memref<1x128xf32, #tpu.memory_space<vmem>>, %arg4: memref<1x128xf32, #tpu.memory_space<vmem>>, %arg5: memref<8x128xf32, #tpu.memory_space<vmem>>) attributes {dimension_semantics = [#tpu.dimension_semantics<parallel>], iteration_bounds = array<i64: 1>, scalar_prefetch = 0 : i64, scratch_operands = 0 : i64, tpu.core_type = #tpu.core_type<tc>, window_params = [{pipeline_mode = #tpu.pipeline_mode<synchronous>, transform_indices = @transform_0, window_bounds = array<i64: 8, 32>}, {transform_indices = @transform_1, window_bounds = array<i64: 32, 128>}, {transform_indices = @transform_2, window_bounds = array<i64: 1, 128>}, {transform_indices = @transform_3, window_bounds = array<i64: 1, 128>}, {transform_indices = @transform_4, window_bounds = array<i64: 8, 128>}]} {
    %c0 = arith.constant 0 : index
    %c0_0 = arith.constant 0 : index
    %0 = vector.load %arg1[%c0, %c0_0] : memref<8x32xbf16, #tpu.memory_space<vmem>>, vector<8x32xbf16>
    %c0_1 = arith.constant 0 : index
    %c0_2 = arith.constant 0 : index
    %1 = vector.load %arg2[%c0_1, %c0_2] : memref<32x128xbf16, #tpu.memory_space<vmem>>, vector<32x128xbf16>
    %cst = arith.constant dense<0.000000e+00> : vector<8x128xf32>
    %2 = tpu.matmul %0, %1, %cst {dimension_numbers = #tpu.dot_dimension_numbers<[1], [0], [0], [1], [0, 0, 1, 1], [], []>} : vector<8x32xbf16>, vector<32x128xbf16>, vector<8x128xf32> -> vector<8x128xf32>
    %cst_3 = arith.constant dense<0.000000e+00> : vector<128xf32>
    %3 = vector.multi_reduction <add>, %2, %cst_3 [0] : vector<8x128xf32> to vector<128xf32>
    %4 = vector.shape_cast %3 : vector<128xf32> to vector<1x128xf32>
    %cst_4 = arith.constant 1.250000e-01 : f32
    %5 = vector.broadcast %cst_4 : f32 to vector<1x128xf32>
    %6 = arith.mulf %4, %5 : vector<1x128xf32>
    %7 = vector.broadcast %6 : vector<1x128xf32> to vector<8x128xf32>
    %8 = arith.subf %2, %7 : vector<8x128xf32>
    %9 = arith.mulf %8, %8 : vector<8x128xf32>
    %cst_5 = arith.constant dense<0.000000e+00> : vector<128xf32>
    %10 = vector.multi_reduction <add>, %9, %cst_5 [0] : vector<8x128xf32> to vector<128xf32>
    %11 = vector.shape_cast %10 : vector<128xf32> to vector<1x128xf32>
    %cst_6 = arith.constant 1.250000e-01 : f32
    %12 = vector.broadcast %cst_6 : f32 to vector<1x128xf32>
    %13 = arith.mulf %11, %12 : vector<1x128xf32>
    %cst_7 = arith.constant 9.99999974E-6 : f32
    %14 = vector.broadcast %cst_7 : f32 to vector<1x128xf32>
    %15 = arith.addf %13, %14 : vector<1x128xf32>
    %16 = math.rsqrt %15 : vector<1x128xf32>
    %c0_8 = arith.constant 0 : index
    %c0_9 = arith.constant 0 : index
    %17 = vector.load %arg3[%c0_8, %c0_9] : memref<1x128xf32, #tpu.memory_space<vmem>>, vector<1x128xf32>
    %18 = arith.mulf %17, %16 : vector<1x128xf32>
    %19 = vector.broadcast %18 : vector<1x128xf32> to vector<8x128xf32>
    %20 = arith.mulf %8, %19 : vector<8x128xf32>
    %c0_10 = arith.constant 0 : index
    %c0_11 = arith.constant 0 : index
    %21 = vector.load %arg4[%c0_10, %c0_11] : memref<1x128xf32, #tpu.memory_space<vmem>>, vector<1x128xf32>
    %22 = vector.broadcast %21 : vector<1x128xf32> to vector<8x128xf32>
    %23 = arith.addf %20, %22 : vector<8x128xf32>
    %cst_12 = arith.constant 0.000000e+00 : f32
    %24 = vector.broadcast %cst_12 : f32 to vector<8x128xf32>
    %25 = arith.maximumf %23, %24 : vector<8x128xf32>
    %c0_13 = arith.constant 0 : index
    %c0_14 = arith.constant 0 : index
    %26 = vector.load %arg5[%c0_13, %c0_14] : memref<8x128xf32, #tpu.memory_space<vmem>>, vector<8x128xf32>
    tpu.vector_store %arg5[%c0_13, %c0_14], %25 {strides = array<i32>} : memref<8x128xf32, #tpu.memory_space<vmem>>, vector<8x128xf32>,
    return
  }
  func.func @transform_0(%arg0: i32) -> (i32, i32) {
    %c0_i32 = arith.constant 0 : i32
    %c0_i32_0 = arith.constant 0 : i32
    %c0_i32_1 = arith.constant 0 : i32
    return %c0_i32, %c0_i32_0 : i32, i32
  }
  func.func @transform_1(%arg0: i32) -> (i32, i32) {
    %c0_i32 = arith.constant 0 : i32
    %c0_i32_0 = arith.constant 0 : i32
    return %c0_i32, %arg0 : i32, i32
  }
  func.func @transform_2(%arg0: i32) -> (i32, i32) {
    %c0_i32 = arith.constant 0 : i32
    %c0_i32_0 = arith.constant 0 : i32
    return %c0_i32, %arg0 : i32, i32
  }
  func.func @transform_3(%arg0: i32) -> (i32, i32) {
    %c0_i32 = arith.constant 0 : i32
    %c0_i32_0 = arith.constant 0 : i32
    return %c0_i32, %arg0 : i32, i32
  }
  func.func @transform_4(%arg0: i32) -> (i32, i32) {
    %c0_i32 = arith.constant 0 : i32
    %c0_i32_0 = arith.constant 0 : i32
    return %c0_i32, %arg0 : i32, i32
  }
}

</mosaic_0001>

<llo_original>
// kernel: mlp_forward.1
$region0: #{mlp_forward.1}
  #allocation0 [shape = 'u32[]', space=smem, size = 0x4, offset = 0x4, fixed_abs, tag = 'smem constant byte address 0x4 - core index']
  #allocation1 [shape = 'u32[144,128]{1,0:T(1,128)}', space=vmem, size = 0x12000, scoped, tag = 'internal scratch']
  %s0 = inlined_call_operand.vmem [shape: bf16[8,32], index: 0, kind: input, shape index: {}]
  %s1 = inlined_call_operand.hbm [shape: bf16[32,128], index: 1, kind: input, shape index: {}]
  %s2 = inlined_call_operand.vmem [shape: f32[1,128], index: 2, kind: input, shape index: {}]
  %s3 = inlined_call_operand.vmem [shape: f32[1,128], index: 3, kind: input, shape index: {}]
  %s4 = inlined_call_operand.hbm [shape: f32[8,64], index: 4, kind: output, shape index: {}]
  %s5 = sld [smem:[#allocation0]]
  $region30: #{mlp_forward.1} parent=0
    _
  %s7 = ssub.s32 1, %s5
  %s8 = scalar_select 0, %s7, %s5
  $region1: #{mlp_forward.1} parent=0
    #allocation2 [shape = 'u8[8192]{0}', space=vmem, size = 0x2000, scoped, tag = 'input window, operand 1, single buffered']
    #allocation3 [shape = 's32[1]{0}', space=sflag, size = 0x4, scoped, tag = 'scoped memory for mlp_forward.1']
    #allocation4 [shape = 's32[1]{0}', space=sflag, size = 0x4, scoped, tag = 'scoped memory for mlp_forward.1']
    #allocation5 [shape = 'u8[4096]{0}', space=vmem, size = 0x1000, scoped, tag = 'output window, operand 0, single buffered']
    %9 = vsyncpa [#allocation3], 0
    %10 = vsyncpa [#allocation4], 0
    // Predicated region
    $region2: #{mlp_forward.1} parent=1 // pred_check
      _
    $region3: #{mlp_forward.1} parent=1 // pred_check_branch
      %12 = sbr.rel (0) target = $region5
    $region4: #{mlp_forward.1} parent=1 // pred_region
      _
    $region5: #{mlp_forward.1} parent=1 // pred_fallthru
      _
    // Predicated region
    $region6: #{mlp_forward.1} parent=1 // pred_check
      _
    $region7: #{mlp_forward.1} parent=1 // pred_check_branch
      %14 = sbr.rel (0) target = $region9
    $region8: #{mlp_forward.1} parent=1 // pred_region
      %s16 = ssub.s32 256, 256
      %17 = vsyncadd [#allocation3], %s16
      %s18 = sshll.u32 [#allocation2], 4
      %s19 = int_to_ptr.vmem [resolvable:$true] %s18
      %24 = dma.hbm_to_vmem [thread:$0]  %s1, 256, %s19, [#allocation3], 64, 64, 4
    $region9: #{mlp_forward.1} parent=1 // pred_fallthru
      _
    // Predicated region
    $region10: #{mlp_forward.1} parent=1 // pred_check
      _
    $region11: #{mlp_forward.1} parent=1 // pred_check_branch
      %26 = sbr.rel (0) target = $region13
    $region12: #{mlp_forward.1} parent=1 // pred_region
      _
    $region13: #{mlp_forward.1} parent=1 // pred_fallthru
      _
    // Predicated region
    $region14: #{mlp_forward.1} parent=1 // pred_check
      _
    $region15: #{mlp_forward.1} parent=1 // pred_check_branch
      %28 = sbr.rel (0) target = $region17
    $region16: #{mlp_forward.1} parent=1 // pred_region
      _
    $region17: #{mlp_forward.1} parent=1 // pred_fallthru
      _
    // Predicated region
    $region18: #{mlp_forward.1} parent=1 // pred_check
      _
    $region19: #{mlp_forward.1} parent=1 // pred_check_branch
      %30 = sbr.rel (0) target = $region21
    $region20: #{mlp_forward.1} parent=1 // pred_region
      %31 = dma.done [#allocation3], 256
    $region21: #{mlp_forward.1} parent=1 // pred_fallthru
      _
    %v33 = vld [vmem:[%s0] sm:$0xf]
    %v34 = vld [vmem:[#allocation2] sm:$0xf]
    %v35 = vld [vmem:[#allocation2 + $0x4] sm:$0xf]
    %v36 = vld [vmem:[#allocation2 + $0x8] sm:$0xf]
    %v37 = vld [vmem:[#allocation2 + $0xc] sm:$0xf]
    %v42 = vunpack.c.l.b16 %v34
    %v43 = vunpack.c.l.b16 %v35
    %v44 = vunpack.c.l.b16 %v36
    %v45 = vunpack.c.l.b16 %v37
    %v46 = vpack.c.b16 %v43, %v42
    %v47 = vpack.c.b16 %v45, %v44
    %vm50 = vcmask 261120
    %v52 = vsel %vm50, %v33, 0
    %54 = vmatprep.subr.bf16.mxu0 0
    %55 = vmatpush1.bf16.msra.mxu0 %v46
    %56 = vmatprep.subr.bf16.mxu0 0
    %57 = vmatpush1.bf16.msra.mxu0 %v47
    %58 = vmatprep.subr.bf16.mxu0 0
    %59 = vmatpush1.bf16.msra.mxu0 0
    %60 = vmatprep.subr.bf16.mxu0 0
    %61 = vmatpush1.bf16.msra.mxu0 0
    %62 = vmatprep.subr.bf16.mxu0 0
    %63 = vmatpush1.bf16.msra.mxu0 0
    %64 = vmatprep.subr.bf16.mxu0 0
    %65 = vmatpush1.bf16.msra.mxu0 0
    %66 = vmatprep.subr.bf16.mxu0 0
    %67 = vmatpush1.bf16.msra.mxu0 0
    %68 = vmatprep.subr.bf16.mxu0 0
    %69 = vmatpush1.bf16.msra.mxu0 0
    %70 = vmatprep.subr.bf16.mxu0 0
    %71 = vmatpush1.bf16.msra.mxu0 0
    %72 = vmatprep.subr.bf16.mxu0 0
    %73 = vmatpush1.bf16.msra.mxu0 0
    %74 = vmatprep.subr.bf16.mxu0 0
    %75 = vmatpush1.bf16.msra.mxu0 0
    %76 = vmatprep.subr.bf16.mxu0 0
    %77 = vmatpush1.bf16.msra.mxu0 0
    %78 = vmatprep.subr.bf16.mxu0 0
    %79 = vmatpush1.bf16.msra.mxu0 0
    %80 = vmatprep.subr.bf16.mxu0 0
    %81 = vmatpush1.bf16.msra.mxu0 0
    %82 = vmatprep.subr.bf16.mxu0 0
    %83 = vmatpush1.bf16.msra.mxu0 0
    %84 = vmatprep.subr.bf16.mxu0 0
    %85 = vmatpush1.bf16.msra.mxu0 0
    %86 = vmatprep.mubr.bf16.mxu0 0
    %87 = vmatmul.mubr.bf16.gmra.mrb[0].mxu0 %v52
    %v88 = vpop.f32.mrb[0].mxu0
    %v89 = vadd.f32 0.0, %v88
    %v90 = vpop.f32.mrb[0].mxu0
    %v91 = vpop.f32.mrb[0].mxu0
    %v92 = vpop.f32.mrb[0].mxu0
    %93 = vdwg.mxu0
    %v94 = vrot.slane %v89, 4
    %v95 = vadd.f32 %v89, %v94
    %v96 = vrot.slane %v95, 2
    %v97 = vadd.f32 %v95, %v96
    %v98 = vrot.slane %v97, 1
    %v99 = vadd.f32 %v97, %v98
    %v100 = vmul.f32 %v99, 0.125
    %v101 = vsub.f32 %v89, %v100
    %v102 = vmul.f32 %v101, %v101
    %v103 = vrot.slane %v102, 4
    %v104 = vadd.f32 %v102, %v103
    %v105 = vrot.slane %v104, 2
    %v106 = vadd.f32 %v104, %v105
    %v107 = vrot.slane %v106, 1
    %v108 = vadd.f32 %v106, %v107
    %v109 = vmul.f32 %v108, 0.125
    %v110 = vadd.f32 %v109, 1e-05
    %v111 = vrsqrt.pop %v110
    %v112 = vld [vmem:[%s2] sm:$0x1]
    %v113 = vmul.f32 %v112, %v111
    %v115 = vlaneseq
    %v116 = vshrl.u32 %v115, 7
    %v117 = vsub.s32 0, %v116
    %v118 = vrot.slane %v113, %v117
    %v120 = vmul.f32 %v101, %v118
    %v121 = vld [vmem:[%s3] sm:$0x1]
    %v123 = vlaneseq
    %v124 = vshrl.u32 %v123, 7
    %v125 = vsub.s32 0, %v124
    %v126 = vrot.slane %v121, %v125
    %v128 = vadd.f32 %v120, %v126
    %v129 = vmax.f32 %v128, 0.0
    %130 = vst [vmem:[#allocation5] sm:$0xff] %v129
    // Predicated region
    $region22: #{mlp_forward.1} parent=1 // pred_check
      _
    $region23: #{mlp_forward.1} parent=1 // pred_check_branch
      %132 = sbr.rel (0) target = $region25
    $region24: #{mlp_forward.1} parent=1 // pred_region
      %s134 = ssub.s32 128, 128
      %135 = vsyncadd [#allocation4], %s134
      %s137 = sshll.u32 [#allocation5], 4
      %s138 = int_to_ptr.vmem [resolvable:$true] %s137
      %140 = dma.vmem_to_hbm [thread:$0]  %s138, 128, %s4, [#allocation4]
    $region25: #{mlp_forward.1} parent=1 // pred_fallthru
      _
    // Predicated region
    $region26: #{mlp_forward.1} parent=1 // pred_check
      _
    $region27: #{mlp_forward.1} parent=1 // pred_check_branch
      %142 = sbr.rel (0) target = $region29
    $region28: #{mlp_forward.1} parent=1 // pred_region
      %143 = dma.done [#allocation4], 128
    $region29: #{mlp_forward.1} parent=1 // pred_fallthru
      _
    %144 = vsyncpa [#allocation3], 1
    %145 = vsyncpa [#allocation4], 1

</llo_original>
